<compile_context>
chip_gen: v7x
topology: tpu7x:2x2x1
jax: 0.10.0
libtpu: 0.0.40
codegen_flags: <defaults>
</compile_context>

<pallas_src>
import functools

import jax
import jax.numpy as jnp
from jax import lax
from jax.experimental import pallas as pl
from jax.experimental.pallas import tpu as pltpu

# Finite stand-in for -inf: exp(-1e30 - m) underflows to exactly 0 in f32 and
# can never poison the online max with NaNs.
_NEG_BIG = -1e30


def _simclr_kernel(zq_ref, zk_ref, out_ref, m_scr, l_scr, t_scr, *,
                   batch_size, n_valid, tq, tk, mask_padding):
    """One (tq, tk) tile of the 2B x 2B similarity matrix, online logsumexp."""
    qi = pl.program_id(0)          # row-block index      ("parallel")
    ki = pl.program_id(1)          # column-block index   ("arbitrary", reduce)
    nk = pl.num_programs(1)

    @pl.when(ki == 0)
    def _init():
        m_scr[...] = jnp.full_like(m_scr, _NEG_BIG)
        l_scr[...] = jnp.zeros_like(l_scr)
        t_scr[...] = jnp.zeros_like(t_scr)

    # Inputs are already L2-normalized, temperature-scaled (query side) and
    # cast in the wrapper: the MXU emits the scaled similarity tile directly.
    s = lax.dot_general(zq_ref[...], zk_ref[...],
                        dimension_numbers=(((1,), (1,)), ((), ())),
                        preferred_element_type=jnp.float32)        # (tq, tk)

    q0 = qi * tq
    k0 = ki * tk
    rows = q0 + lax.broadcasted_iota(jnp.int32, (tq, 1), 0)        # (tq, 1)
    cols = k0 + lax.broadcasted_iota(jnp.int32, (1, tk), 1)        # (1, tk)

    # Column masking (diagonal self-similarity and, if padded, columns >= n)
    # gated on a scalar tile predicate so the steady-state majority of tiles
    # skips the (tq, tk) compare+select entirely.
    needs_mask = (q0 < k0 + tk) & (k0 < q0 + tq)          # tile touches diag?
    if mask_padding:
        needs_mask = needs_mask | (k0 + tk > n_valid)     # tile touches padding?

    def _apply_mask(x):
        bad = rows == cols
        if mask_padding:
            bad = bad | (cols >= n_valid)
        return jnp.where(bad, jnp.float32(_NEG_BIG), x)

    s = lax.cond(needs_mask, _apply_mask, lambda x: x, s)

    # Online logsumexp across column blocks.
    m_prev = m_scr[...]
    m_new = jnp.maximum(m_prev, jnp.max(s, axis=-1, keepdims=True))
    alpha = jnp.exp(m_prev - m_new)
    l_scr[...] = alpha * l_scr[...] + jnp.sum(jnp.exp(s - m_new), axis=-1,
                                              keepdims=True)
    m_scr[...] = m_new

    # Positive-pair logit lives in exactly one column per real row
    # (label(i) = i + B for i < B, i - B otherwise).  Only the few tiles whose
    # column range can contain such a column do the masked reduce.
    pos_hit = (((q0 + batch_size < k0 + tk) & (k0 < q0 + tq + batch_size)) |
               ((q0 - batch_size < k0 + tk) & (k0 < q0 + tq - batch_size)))

    @pl.when(pos_hit)
    def _accum_target():
        positive = (((rows < batch_size) & (cols == rows + batch_size)) |
                    ((rows >= batch_size) & (cols == rows - batch_size)))
        t_scr[...] = t_scr[...] + jnp.sum(jnp.where(positive, s, 0.0),
                                          axis=-1, keepdims=True)

    @pl.when(ki == nk - 1)
    def _finalize():
        # Per-row cross entropy: lse(row) - sim[row, label(row)], stored as a
        # lane-dense (1, 1, tq) block (unmasked stores).
        loss = m_scr[...] + jnp.log(l_scr[...]) - t_scr[...]       # (tq, 1)
        out_ref[...] = loss.T.reshape(1, 1, tq)


def _pow2_floor(x):
    p = 1
    while p * 2 <= x:
        p *= 2
    return p


def _vmem_bytes(tq, tk, d, in_itemsize):
    """Conservative VMEM estimate for one grid step (double-buffered blocks)."""
    blocks = 2 * (tq + tk) * d * in_itemsize        # in-block double buffers
    out = 2 * tq * 4
    scratch = 3 * tq * 4
    temps = 4 * tq * tk * 4                         # s / exp / mask temporaries
    return blocks + out + scratch + temps


def _choose_tiles(n, d, in_itemsize, tq_cap, tk_cap, budget, allow_resident_key):
    """Pick (tq, tk, n_pad).  Power-of-two tiles; n padded to a multiple."""
    # Row tile: biggest power of two <= tq_cap, but keep >= 2 row blocks when
    # possible so the "parallel" row axis shards across v7x's 2 TensorCores.
    tq = _pow2_floor(max(8, min(int(tq_cap), pl.next_power_of_2(pl.cdiv(n, 2)))))
    n_pad_q = pl.cdiv(n, tq) * tq

    # Resident key (tk = n): key rows are DMA'd from HBM exactly once.
    if allow_resident_key and _vmem_bytes(tq, n_pad_q, d, in_itemsize) <= budget:
        return tq, n_pad_q, n_pad_q

    # Streamed key: largest power-of-two column tile that fits the budget.
    tk = _pow2_floor(max(8, min(int(tk_cap), pl.next_power_of_2(n))))
    while tk > 128 and _vmem_bytes(tq, tk, d, in_itemsize) > budget:
        tk //= 2
    while tq > 8 and _vmem_bytes(tq, tk, d, in_itemsize) > budget:
        tq //= 2
    step = max(tq, tk)
    n_pad = pl.cdiv(n, step) * step
    return tq, tk, n_pad


def _vmem_budget_and_limit():
    """(tile budget, scoped vmem limit) derived from the detected chip."""
    try:
        cap = int(pltpu.get_tpu_info().vmem_capacity_bytes)
    except Exception:
        cap = 64 * 1024 * 1024          # conservative (v7x-sized) fallback
    return int(cap * 0.55), int(cap * 0.84)


def simclr_loss(z1, z2, temperature=0.1, *,
                matmul_dtype=jnp.bfloat16,
                tq_cap=512, tk_cap=2048,
                allow_resident_key=True,
                key_buffer_count=None,        # e.g. 3 on v5e if keys are streamed
                vmem_budget_bytes=None, vmem_limit_bytes=None):
    """NT-Xent (SimCLR) loss.  z1, z2: [B, D]."""
    assert z1.shape == z2.shape and z1.ndim == 2
    b, d = z1.shape
    n = 2 * b
    inv_temp = 1.0 / float(temperature)

    # Hoisted out of the kernel: concat, L2-normalize, fold 1/temperature into
    # the query copy, cast to matmul_dtype -- one fused XLA pass over z instead
    # of per-grid-step redundant work, and the kernel streams bf16 keys.
    # (rsqrt(max(||z||^2, 1e-16)) matches torch's max(norm_i*norm_j, 1e-8)
    # for all non-degenerate rows.)
    z = jnp.concatenate([z1, z2], axis=0).astype(jnp.float32)       # (2B, D)
    inv_norm = lax.rsqrt(jnp.maximum(jnp.sum(z * z, axis=-1, keepdims=True),
                                     1e-16))
    zn = z * inv_norm
    zq = (zn * inv_temp).astype(matmul_dtype)    # queries carry the 1/temp fold
    zk = zn.astype(matmul_dtype)

    default_budget, default_limit = _vmem_budget_and_limit()
    budget = default_budget if vmem_budget_bytes is None else int(vmem_budget_bytes)
    limit = default_limit if vmem_limit_bytes is None else int(vmem_limit_bytes)

    itemsize = jnp.dtype(matmul_dtype).itemsize
    tq, tk, n_pad = _choose_tiles(n, d, itemsize, tq_cap, tk_cap, budget,
                                  allow_resident_key)

    if n_pad > n:  # pad rows (masked in-kernel) instead of a giant fallback block
        zq = jnp.pad(zq, ((0, n_pad - n), (0, 0)))
        zk = jnp.pad(zk, ((0, n_pad - n), (0, 0)))

    grid = (n_pad // tq, n_pad // tk)

    key_spec_kwargs = {}
    if key_buffer_count is not None and tk < n_pad:
        key_spec_kwargs["pipeline_mode"] = pl.Buffered(int(key_buffer_count))

    kernel = functools.partial(
        _simclr_kernel,
        batch_size=b, n_valid=n, tq=tq, tk=tk, mask_padding=(n_pad > n))

    per_block = pl.pallas_call(
        kernel,
        out_shape=jax.ShapeDtypeStruct((n_pad // tq, 1, tq), jnp.float32),
        grid_spec=pltpu.PrefetchScalarGridSpec(
            num_scalar_prefetch=0,
            grid=grid,
            in_specs=[
                pl.BlockSpec((tq, d), lambda qi, ki: (qi, 0)),     # query rows
                pl.BlockSpec((tk, d), lambda qi, ki: (ki, 0),      # key rows
                             **key_spec_kwargs),
            ],
            out_specs=pl.BlockSpec((1, 1, tq), lambda qi, ki: (qi, 0, 0)),
            scratch_shapes=[
                pltpu.VMEM((tq, 1), jnp.float32),   # running max  m
                pltpu.VMEM((tq, 1), jnp.float32),   # running sum  l
                pltpu.VMEM((tq, 1), jnp.float32),   # positive-pair logit
            ]),
        compiler_params=pltpu.CompilerParams(
            dimension_semantics=("parallel", "arbitrary"),
            vmem_limit_bytes=limit),
    )(zq, zk)

    # Tiny final reduce in the wrapper; padded rows excluded from the mean.
    per_row = per_block.reshape(-1)[:n]
    return jnp.mean(per_row)


def _simclr_loss_ref(z1, z2, temperature=0.1):
    """Pure-JAX reference mirroring the PyTorch module."""
    b = z1.shape[0]
    z = jnp.concatenate([z1, z2], axis=0).astype(jnp.float32)
    n = 2 * b
    norm = jnp.sqrt(jnp.sum(z * z, axis=-1, keepdims=True))
    dots = jnp.dot(z, z.T, precision=lax.Precision.HIGHEST)
    sim = dots / jnp.maximum(norm * norm.T, 1e-8) / temperature
    sim = jnp.where(jnp.eye(n, dtype=bool), -jnp.inf, sim)
    labels = jnp.mod(jnp.arange(n) + b, n)
    logp = sim - jax.scipy.special.logsumexp(sim, axis=-1, keepdims=True)
    return -jnp.mean(logp[jnp.arange(n), labels])


if __name__ == "__main__":
    key = jax.random.PRNGKey(0)
    k1, k2, k3, k4 = jax.random.split(key, 4)

    batch, proj_dim = 8, 32
    z1 = jax.random.normal(k1, (batch, proj_dim), dtype=jnp.float32)
    z2 = jax.random.normal(k2, (batch, proj_dim), dtype=jnp.float32)
    ref = jax.block_until_ready(_simclr_loss_ref(z1, z2, temperature=0.1))

    # 1) Default fast path: bf16-normalized rows fed to the MXU, resident key.
    loss_bf16 = jax.block_until_ready(simclr_loss(z1, z2, temperature=0.1))
    assert jnp.allclose(loss_bf16, ref, rtol=5e-2, atol=5e-2), (loss_bf16, ref)

    # 2) f32-fed MXU path.
    loss_f32 = jax.block_until_ready(
        simclr_loss(z1, z2, temperature=0.1, matmul_dtype=jnp.float32))
    assert jnp.allclose(loss_f32, ref, rtol=2e-2, atol=2e-2), (loss_f32, ref)

    # 3) Forced multi-tile streaming: exercises the gated diagonal /
    #    positive-pair masking on tiles that do and don't need it.
    loss_tiled = jax.block_until_ready(
        simclr_loss(z1, z2, temperature=0.1, matmul_dtype=jnp.float32,
                    tq_cap=8, tk_cap=8, allow_resident_key=False))
    assert jnp.allclose(loss_tiled, ref, rtol=2e-2, atol=2e-2), (loss_tiled, ref)

    # 4) Batch needing row/column padding (n = 12 -> padded to 16).
    batch2, dim2 = 6, 24
    w1 = jax.random.normal(k3, (batch2, dim2), dtype=jnp.float32)
    w2 = jax.random.normal(k4, (batch2, dim2), dtype=jnp.float32)
    ref2 = jax.block_until_ready(_simclr_loss_ref(w1, w2, temperature=0.2))
    loss_pad = jax.block_until_ready(
        simclr_loss(w1, w2, temperature=0.2, matmul_dtype=jnp.float32,
                    tq_cap=8, tk_cap=8, allow_resident_key=False))
    assert jnp.allclose(loss_pad, ref2, rtol=2e-2, atol=2e-2), (loss_pad, ref2)

    print("KERNEL_OK")
</pallas_src>

<mosaic_0001>
module attributes {stable_mosaic.version = 11 : i64} {
  func.func @_simclr_kernel(%arg0: i32, %arg1: i32, %arg2: memref<8x32xbf16, #tpu.memory_space<vmem>>, %arg3: memref<16x32xbf16, #tpu.memory_space<vmem>>, %arg4: memref<1x1x8xf32, #tpu.memory_space<vmem>>, %arg5: memref<8x1xf32, #tpu.memory_space<vmem>>, %arg6: memref<8x1xf32, #tpu.memory_space<vmem>>, %arg7: memref<8x1xf32, #tpu.memory_space<vmem>>) attributes {dimension_semantics = [#tpu.dimension_semantics<parallel>, #tpu.dimension_semantics<arbitrary>], iteration_bounds = array<i64: 2, 1>, scalar_prefetch = 0 : i64, scratch_operands = 3 : i64, tpu.core_type = #tpu.core_type<tc>, window_params = [{transform_indices = @transform_0, window_bounds = array<i64: 8, 32>}, {transform_indices = @transform_1, window_bounds = array<i64: 16, 32>}, {transform_indices = @transform_2, window_bounds = array<i64: 1, 1, 8>}]} {
    %c0_i32 = arith.constant 0 : i32
    %0 = arith.cmpi eq, %arg1, %c0_i32 : i32
    %1 = arith.extui %0 : i1 to i32
    %c0_i32_0 = arith.constant 0 : i32
    %2 = arith.cmpi ne, %1, %c0_i32_0 : i32
    scf.if %2 {
      %cst_28 = arith.constant -1.000000e+30 : f32
      %58 = vector.broadcast %cst_28 : f32 to vector<8x1xf32>
      %c0_29 = arith.constant 0 : index
      %c0_30 = arith.constant 0 : index
      %59 = vector.load %arg5[%c0_29, %c0_30] : memref<8x1xf32, #tpu.memory_space<vmem>>, vector<8x1xf32>
      tpu.vector_store %arg5[%c0_29, %c0_30], %58 {strides = array<i32>} : memref<8x1xf32, #tpu.memory_space<vmem>>, vector<8x1xf32>,
      %cst_31 = arith.constant 0.000000e+00 : f32
      %60 = vector.broadcast %cst_31 : f32 to vector<8x1xf32>
      %c0_32 = arith.constant 0 : index
      %c0_33 = arith.constant 0 : index
      %61 = vector.load %arg6[%c0_32, %c0_33] : memref<8x1xf32, #tpu.memory_space<vmem>>, vector<8x1xf32>
      tpu.vector_store %arg6[%c0_32, %c0_33], %60 {strides = array<i32>} : memref<8x1xf32, #tpu.memory_space<vmem>>, vector<8x1xf32>,
      %cst_34 = arith.constant 0.000000e+00 : f32
      %62 = vector.broadcast %cst_34 : f32 to vector<8x1xf32>
      %c0_35 = arith.constant 0 : index
      %c0_36 = arith.constant 0 : index
      %63 = vector.load %arg7[%c0_35, %c0_36] : memref<8x1xf32, #tpu.memory_space<vmem>>, vector<8x1xf32>
      tpu.vector_store %arg7[%c0_35, %c0_36], %62 {strides = array<i32>} : memref<8x1xf32, #tpu.memory_space<vmem>>, vector<8x1xf32>,
    } else {
    }
    %c0 = arith.constant 0 : index
    %c0_1 = arith.constant 0 : index
    %3 = vector.load %arg2[%c0, %c0_1] : memref<8x32xbf16, #tpu.memory_space<vmem>>, vector<8x32xbf16>
    %c0_2 = arith.constant 0 : index
    %c0_3 = arith.constant 0 : index
    %4 = vector.load %arg3[%c0_2, %c0_3] : memref<16x32xbf16, #tpu.memory_space<vmem>>, vector<16x32xbf16>
    %cst = arith.constant dense<0.000000e+00> : vector<8x16xf32>
    %5 = tpu.matmul %3, %4, %cst {dimension_numbers = #tpu.dot_dimension_numbers<[1], [1], [0], [0], [0, 0, 1, 0], [], []>} : vector<8x32xbf16>, vector<16x32xbf16>, vector<8x16xf32> -> vector<8x16xf32>
    %c8_i32 = arith.constant 8 : i32
    %6 = arith.muli %arg0, %c8_i32 : i32
    %c16_i32 = arith.constant 16 : i32
    %7 = arith.muli %arg1, %c16_i32 : i32
    %8 = tpu.iota {dimensions = array<i32: 0>} : vector<8x1xi32>
    %9 = vector.broadcast %6 : i32 to vector<8x1xi32>
    %10 = arith.addi %9, %8 : vector<8x1xi32>
    %11 = tpu.iota {dimensions = array<i32: 1>} : vector<1x16xi32>
    %12 = vector.broadcast %7 : i32 to vector<1x16xi32>
    %13 = arith.addi %12, %11 : vector<1x16xi32>
    %c16_i32_4 = arith.constant 16 : i32
    %14 = arith.addi %7, %c16_i32_4 : i32
    %15 = arith.cmpi slt, %6, %14 : i32
    %c8_i32_5 = arith.constant 8 : i32
    %16 = arith.addi %6, %c8_i32_5 : i32
    %17 = arith.cmpi slt, %7, %16 : i32
    %18 = arith.andi %15, %17 : i1
    %19 = arith.extui %18 : i1 to i32
    %c0_i32_6 = arith.constant 0 : i32
    %20 = arith.cmpi ne, %19, %c0_i32_6 : i32
    %21 = scf.if %20 -> (vector<8x16xf32>) {
      %58 = vector.broadcast %10 : vector<8x1xi32> to vector<8x16xi32>
      %59 = vector.broadcast %13 : vector<1x16xi32> to vector<8x16xi32>
      %60 = arith.cmpi eq, %58, %59 : vector<8x16xi32>
      %cst_28 = arith.constant -1.000000e+30 : f32
      %61 = vector.broadcast %cst_28 : f32 to vector<8x16xf32>
      %62 = arith.select %60, %61, %5 : vector<8x16xi1>, vector<8x16xf32>
      scf.yield %62 : vector<8x16xf32>
    } else {
      scf.yield %5 : vector<8x16xf32>
    }
    %c0_7 = arith.constant 0 : index
    %c0_8 = arith.constant 0 : index
    %22 = vector.load %arg5[%c0_7, %c0_8] : memref<8x1xf32, #tpu.memory_space<vmem>>, vector<8x1xf32>
    %cst_9 = arith.constant dense<0xFF800000> : vector<8xf32>
    %23 = vector.multi_reduction <maximumf>, %21, %cst_9 [1] : vector<8x16xf32> to vector<8xf32>
    %24 = vector.shape_cast %23 : vector<8xf32> to vector<8x1xf32>
    %25 = arith.maximumf %22, %24 : vector<8x1xf32>
    %26 = arith.subf %22, %25 : vector<8x1xf32>
    %27 = math.exp %26 : vector<8x1xf32>
    %c0_10 = arith.constant 0 : index
    %c0_11 = arith.constant 0 : index
    %28 = vector.load %arg6[%c0_10, %c0_11] : memref<8x1xf32, #tpu.memory_space<vmem>>, vector<8x1xf32>
    %29 = arith.mulf %27, %28 : vector<8x1xf32>
    %30 = vector.broadcast %25 : vector<8x1xf32> to vector<8x16xf32>
    %31 = arith.subf %21, %30 : vector<8x16xf32>
    %32 = math.exp %31 : vector<8x16xf32>
    %cst_12 = arith.constant dense<0.000000e+00> : vector<8xf32>
    %33 = vector.multi_reduction <add>, %32, %cst_12 [1] : vector<8x16xf32> to vector<8xf32>
    %34 = vector.shape_cast %33 : vector<8xf32> to vector<8x1xf32>
    %35 = arith.addf %29, %34 : vector<8x1xf32>
    %c0_13 = arith.constant 0 : index
    %c0_14 = arith.constant 0 : index
    %36 = vector.load %arg6[%c0_13, %c0_14] : memref<8x1xf32, #tpu.memory_space<vmem>>, vector<8x1xf32>
    tpu.vector_store %arg6[%c0_13, %c0_14], %35 {strides = array<i32>} : memref<8x1xf32, #tpu.memory_space<vmem>>, vector<8x1xf32>,
    %c0_15 = arith.constant 0 : index
    %c0_16 = arith.constant 0 : index
    %37 = vector.load %arg5[%c0_15, %c0_16] : memref<8x1xf32, #tpu.memory_space<vmem>>, vector<8x1xf32>
    tpu.vector_store %arg5[%c0_15, %c0_16], %25 {strides = array<i32>} : memref<8x1xf32, #tpu.memory_space<vmem>>, vector<8x1xf32>,
    %c8_i32_17 = arith.constant 8 : i32
    %38 = arith.addi %6, %c8_i32_17 : i32
    %c16_i32_18 = arith.constant 16 : i32
    %39 = arith.addi %7, %c16_i32_18 : i32
    %40 = arith.cmpi slt, %38, %39 : i32
    %c8_i32_19 = arith.constant 8 : i32
    %41 = arith.addi %6, %c8_i32_19 : i32
    %c8_i32_20 = arith.constant 8 : i32
    %42 = arith.addi %41, %c8_i32_20 : i32
    %43 = arith.cmpi slt, %7, %42 : i32
    %44 = arith.andi %40, %43 : i1
    %c8_i32_21 = arith.constant 8 : i32
    %45 = arith.subi %6, %c8_i32_21 : i32
    %c16_i32_22 = arith.constant 16 : i32
    %46 = arith.addi %7, %c16_i32_22 : i32
    %47 = arith.cmpi slt, %45, %46 : i32
    %c8_i32_23 = arith.constant 8 : i32
    %48 = arith.addi %6, %c8_i32_23 : i32
    %c8_i32_24 = arith.constant 8 : i32
    %49 = arith.subi %48, %c8_i32_24 : i32
    %50 = arith.cmpi slt, %7, %49 : i32
    %51 = arith.andi %47, %50 : i1
    %52 = arith.ori %44, %51 : i1
    %53 = arith.extui %52 : i1 to i32
    %c0_i32_25 = arith.constant 0 : i32
    %54 = arith.cmpi ne, %53, %c0_i32_25 : i32
    scf.if %54 {
      %c8_i32_28 = arith.constant 8 : i32
      %58 = vector.broadcast %c8_i32_28 : i32 to vector<8x1xi32>
      %59 = arith.cmpi slt, %10, %58 : vector<8x1xi32>
      %c8_i32_29 = arith.constant 8 : i32
      %60 = vector.broadcast %c8_i32_29 : i32 to vector<8x1xi32>
      %61 = arith.addi %10, %60 : vector<8x1xi32>
      %62 = vector.broadcast %13 : vector<1x16xi32> to vector<8x16xi32>
      %63 = vector.broadcast %61 : vector<8x1xi32> to vector<8x16xi32>
      %64 = arith.cmpi eq, %62, %63 : vector<8x16xi32>
      %65 = vector.broadcast %59 : vector<8x1xi1> to vector<8x16xi1>
      %66 = arith.andi %65, %64 : vector<8x16xi1>
      %c8_i32_30 = arith.constant 8 : i32
      %67 = vector.broadcast %c8_i32_30 : i32 to vector<8x1xi32>
      %68 = arith.cmpi sge, %10, %67 : vector<8x1xi32>
      %c8_i32_31 = arith.constant 8 : i32
      %69 = vector.broadcast %c8_i32_31 : i32 to vector<8x1xi32>
      %70 = arith.subi %10, %69 : vector<8x1xi32>
      %71 = vector.broadcast %13 : vector<1x16xi32> to vector<8x16xi32>
      %72 = vector.broadcast %70 : vector<8x1xi32> to vector<8x16xi32>
      %73 = arith.cmpi eq, %71, %72 : vector<8x16xi32>
      %74 = vector.broadcast %68 : vector<8x1xi1> to vector<8x16xi1>
      %75 = arith.andi %74, %73 : vector<8x16xi1>
      %76 = arith.ori %66, %75 : vector<8x16xi1>
      %c0_32 = arith.constant 0 : index
      %c0_33 = arith.constant 0 : index
      %77 = vector.load %arg7[%c0_32, %c0_33] : memref<8x1xf32, #tpu.memory_space<vmem>>, vector<8x1xf32>
      %cst_34 = arith.constant 0.000000e+00 : f32
      %78 = vector.broadcast %cst_34 : f32 to vector<8x16xf32>
      %79 = arith.select %76, %21, %78 : vector<8x16xi1>, vector<8x16xf32>
      %cst_35 = arith.constant dense<0.000000e+00> : vector<8xf32>
      %80 = vector.multi_reduction <add>, %79, %cst_35 [1] : vector<8x16xf32> to vector<8xf32>
      %81 = vector.shape_cast %80 : vector<8xf32> to vector<8x1xf32>
      %82 = arith.addf %77, %81 : vector<8x1xf32>
      %c0_36 = arith.constant 0 : index
      %c0_37 = arith.constant 0 : index
      %83 = vector.load %arg7[%c0_36, %c0_37] : memref<8x1xf32, #tpu.memory_space<vmem>>, vector<8x1xf32>
      tpu.vector_store %arg7[%c0_36, %c0_37], %82 {strides = array<i32>} : memref<8x1xf32, #tpu.memory_space<vmem>>, vector<8x1xf32>,
    } else {
    }
    %c0_i32_26 = arith.constant 0 : i32
    %55 = arith.cmpi eq, %arg1, %c0_i32_26 : i32
    %56 = arith.extui %55 : i1 to i32
    %c0_i32_27 = arith.constant 0 : i32
    %57 = arith.cmpi ne, %56, %c0_i32_27 : i32
    scf.if %57 {
      %c0_28 = arith.constant 0 : index
      %c0_29 = arith.constant 0 : index
      %58 = vector.load %arg5[%c0_28, %c0_29] : memref<8x1xf32, #tpu.memory_space<vmem>>, vector<8x1xf32>
      %c0_30 = arith.constant 0 : index
      %c0_31 = arith.constant 0 : index
      %59 = vector.load %arg6[%c0_30, %c0_31] : memref<8x1xf32, #tpu.memory_space<vmem>>, vector<8x1xf32>
      %60 = math.log %59 : vector<8x1xf32>
      %61 = arith.addf %58, %60 : vector<8x1xf32>
      %c0_32 = arith.constant 0 : index
      %c0_33 = arith.constant 0 : index
      %62 = vector.load %arg7[%c0_32, %c0_33] : memref<8x1xf32, #tpu.memory_space<vmem>>, vector<8x1xf32>
      %63 = arith.subf %61, %62 : vector<8x1xf32>
      %64 = tpu.transpose %63, [1, 0] : vector<8x1xf32> -> vector<1x8xf32>
      %65 = vector.shape_cast %64 : vector<1x8xf32> to vector<1x1x8xf32>
      %c0_34 = arith.constant 0 : index
      %c0_35 = arith.constant 0 : index
      %c0_36 = arith.constant 0 : index
      %66 = vector.load %arg4[%c0_34, %c0_35, %c0_36] : memref<1x1x8xf32, #tpu.memory_space<vmem>>, vector<1x1x8xf32>
      tpu.vector_store %arg4[%c0_34, %c0_35, %c0_36], %65 {strides = array<i32>} : memref<1x1x8xf32, #tpu.memory_space<vmem>>, vector<1x1x8xf32>,
    } else {
    }
    return
  }
  func.func @transform_0(%arg0: i32, %arg1: i32) -> (i32, i32) {
    %c0_i32 = arith.constant 0 : i32
    %c0_i32_0 = arith.constant 0 : i32
    return %arg0, %c0_i32 : i32, i32
  }
  func.func @transform_1(%arg0: i32, %arg1: i32) -> (i32, i32) {
    %c0_i32 = arith.constant 0 : i32
    %c0_i32_0 = arith.constant 0 : i32
    return %arg1, %c0_i32 : i32, i32
  }
  func.func @transform_2(%arg0: i32, %arg1: i32) -> (i32, i32, i32) {
    %c0_i32 = arith.constant 0 : i32
    %c0_i32_0 = arith.constant 0 : i32
    %c0_i32_1 = arith.constant 0 : i32
    return %arg0, %c0_i32, %c0_i32_0 : i32, i32, i32
  }
}

</mosaic_0001>

<llo_original>
// kernel: tpu_custom_call.1
$region0: #{tpu_custom_call.1}
  #allocation0 [shape = 'u32[]', space=smem, size = 0x4, offset = 0x4, fixed_abs, tag = 'smem constant byte address 0x4 - core index']
  #allocation1 [shape = 'u32[144,128]{1,0:T(1,128)}', space=vmem, size = 0x12000, scoped, tag = 'internal scratch']
  #allocation2 [shape = 'f32[8,1]{1,0:T(8,128)}', space=vmem, size = 0x1000, scoped, tag = 'scratch operand']
  #allocation3 [shape = 'f32[8,1]{1,0:T(8,128)}', space=vmem, size = 0x1000, scoped, tag = 'scratch operand']
  #allocation4 [shape = 'f32[8,1]{1,0:T(8,128)}', space=vmem, size = 0x1000, scoped, tag = 'scratch operand']
  %s0 = inlined_call_operand.hbm [shape: bf16[16,32], index: 0, kind: input, shape index: {}]
  %s1 = inlined_call_operand.hbm [shape: bf16[16,32], index: 1, kind: input, shape index: {}]
  %s2 = inlined_call_operand.hbm [shape: f32[2,1,8], index: 2, kind: output, shape index: {}]
  %s3 = sld [smem:[#allocation0]]
  $region69: #{tpu_custom_call.1} parent=0
    _
  %s5 = ssub.s32 1, %s3
  %s6 = scalar_select 0, %s5, %s3
  $region1: #{tpu_custom_call.1} parent=0
    #allocation5 [shape = 'u8[4096]{0}', space=vmem, size = 0x1000, scoped, tag = 'input window, operand 0']
    #allocation6 [shape = 's32[2]{0}', space=sflag, size = 0x8, scoped, tag = 'scoped memory for tpu_custom_call.1']
    #allocation7 [shape = 's32[2]{0}', space=sflag, size = 0x8, scoped, tag = 'scoped memory for tpu_custom_call.1']
    #allocation8 [shape = 'u8[4096]{0}', space=vmem, size = 0x1000, scoped, tag = 'input window, operand 1, single buffered']
    #allocation9 [shape = 's32[1]{0}', space=sflag, size = 0x4, scoped, tag = 'scoped memory for tpu_custom_call.1']
    #allocation10 [shape = 'u8[1024]{0}', space=vmem, size = 0x400, scoped, tag = 'output window, operand 0']
    %7 = vsyncpa [#allocation6], 0
    %s8 = scalar_lea.sflag [#allocation6], 1
    %9 = vsyncpa %s8, 0
    %10 = vsyncpa [#allocation9], 0
    %11 = vsyncpa [#allocation7], 0
    %s12 = scalar_lea.sflag [#allocation7], 1
    %13 = vsyncpa %s12, 0
    loop: start=0, step=1, limit=4
    $region2: #{tpu_custom_call.1} parent=1 // loop_pre_header
      _
    $region3: #{tpu_custom_call.1} parent=1 // loop_header
      %s15 = sphi 0, %s19
      %p16 = scmp.ge.s32.totalorder %s15, 4
      %s22 = sphi 0, %s34
      %s23 = sphi 0, %s30
      %s24 = sphi 0, %s22
      %s25 = sphi 0, %s23
      %s26 = sphi 0, %s24
      %s27 = sphi 0, %s25
      %s37 = sphi 0, %s39
      %s40 = sphi 0, %s37
      %s41 = sphi 0, %s40
      %s57 = sphi 0, %s41
      %s63 = sphi 0, %s65
      %s66 = sphi 0, %s63
      %s67 = sphi 0, %s66
      %s83 = sphi 0, %s67
      %s89 = sphi 0, %s91
      %s92 = sphi 0, %s89
      %s93 = sphi 0, %s92
      %s109 = sphi 0, %s93
    $region4: #{tpu_custom_call.1} parent=1 // loop_header_branch
      %18 = sbr.rel (%p16) target = $region8
    $region5: #{tpu_custom_call.1} parent=1 // loop_body
      %s20 = ssub.s32 %s15, 1
      %s21 = ssub.s32 %s15, 2
      %s28 = sadd.s32 1, %s23
      %p29 = scmp.ge.s32.totalorder %s28, 1
      %s30 = scalar_select %p29, 0, %s28
      %s31 = sadd.s32 1, %s22
      %s32 = scalar_select %p29, %s31, %s22
      %p33 = scmp.ge.s32.totalorder %s32, 2
      %s34 = scalar_select %p33, 0, %s32
      %s35 = ssub.s32 %s22, %s34
      %p36 = scmp.eq.s32.totalorder %s35, 0
      %s38 = sadd.s32 %s37, 1
      %s39 = scalar_select %p36, %s37, %s38
      %p42 = pneg %p36
      %p43 = scmp.eq.s32.totalorder %s15, 1
      %p44 = por %p42, %p43
      %p45 = scmp.ne.s32.totalorder %s37, %s40
      %p46 = scmp.eq.s32.totalorder %s15, 0
      %p47 = por %p45, %p46
      %p48 = scmp.ne.s32.totalorder %s37, %s40
      %p49 = scmp.eq.s32.totalorder %s20, 1
      %p50 = por %p48, %p49
      %p51 = scmp.ne.s32.totalorder %s40, %s41
      %p52 = scmp.eq.s32.totalorder %s20, 0
      %p53 = por %p51, %p52
      %p54 = scmp.ne.s32.totalorder %s40, %s41
      %p55 = scmp.eq.s32.totalorder %s21, 1
      %p56 = por %p54, %p55
      %p58 = scmp.ne.s32.totalorder %s41, %s57
      %p59 = scmp.eq.s32.totalorder %s21, 0
      %p60 = por %p58, %p59
      %s61 = ssub.s32 %s23, %s30
      %p62 = scmp.eq.s32.totalorder %s61, 0
      %s64 = sadd.s32 %s63, 1
      %s65 = scalar_select %p62, %s63, %s64
      %p68 = pneg %p62
      %p69 = scmp.eq.s32.totalorder %s15, 1
      %p70 = por %p68, %p69
      %p71 = scmp.ne.s32.totalorder %s63, %s66
      %p72 = scmp.eq.s32.totalorder %s15, 0
      %p73 = por %p71, %p72
      %p74 = scmp.ne.s32.totalorder %s63, %s66
      %p75 = scmp.eq.s32.totalorder %s20, 1
      %p76 = por %p74, %p75
      %p77 = scmp.ne.s32.totalorder %s66, %s67
      %p78 = scmp.eq.s32.totalorder %s20, 0
      %p79 = por %p77, %p78
      %p80 = scmp.ne.s32.totalorder %s66, %s67
      %p81 = scmp.eq.s32.totalorder %s21, 1
      %p82 = por %p80, %p81
      %p84 = scmp.ne.s32.totalorder %s67, %s83
      %p85 = scmp.eq.s32.totalorder %s21, 0
      %p86 = por %p84, %p85
      %s87 = ssub.s32 %s22, %s34
      %p88 = scmp.eq.s32.totalorder %s87, 0
      %s90 = sadd.s32 %s89, 1
      %s91 = scalar_select %p88, %s89, %s90
      %p94 = pneg %p88
      %p95 = scmp.eq.s32.totalorder %s15, 1
      %p96 = por %p94, %p95
      %p97 = scmp.ne.s32.totalorder %s89, %s92
      %p98 = scmp.eq.s32.totalorder %s15, 0
      %p99 = por %p97, %p98
      %p100 = scmp.ne.s32.totalorder %s89, %s92
      %p101 = scmp.eq.s32.totalorder %s20, 1
      %p102 = por %p100, %p101
      %p103 = scmp.ne.s32.totalorder %s92, %s93
      %p104 = scmp.eq.s32.totalorder %s20, 0
      %p105 = por %p103, %p104
      %p106 = scmp.ne.s32.totalorder %s92, %s93
      %p107 = scmp.eq.s32.totalorder %s21, 1
      %p108 = por %p106, %p107
      %p110 = scmp.ne.s32.totalorder %s93, %s109
      %p111 = scmp.eq.s32.totalorder %s21, 0
      %p112 = por %p110, %p111
      %p113 = scmp.le.s32.totalorder 1, %s15
      %p114 = scmp.lt.s32.totalorder %s15, 3
      %p115 = pnand %p113, %p114
      %p116 = pneg %p115
      // Predicated region
      $region9: #{tpu_custom_call.1} parent=5 // pred_check
        _
      $region10: #{tpu_custom_call.1} parent=5 // pred_check_branch
        %118 = sbr.rel (%p115) target = $region12
      $region11: #{tpu_custom_call.1} parent=5 // pred_region
        %s119 = ssub.s32 %s15, 1
        // Predicated region
        $region13: #{tpu_custom_call.1} parent=11 // pred_check
          %p120 = pneg %p79
        $region14: #{tpu_custom_call.1} parent=11 // pred_check_branch
          %122 = sbr.rel (%p120) target = $region16
        $region15: #{tpu_custom_call.1} parent=11 // pred_region
          %s123 = smul.u32 2, %s25
          %s125 = ssub.s32 128, 128
          %126 = vsyncadd [#allocation9], %s125
          %s127 = smul.addr %s123, 64
          %s128 = scalar_lea.hbm %s1, %s127
          %s129 = sshll.u32 [#allocation8], 4
          %s130 = int_to_ptr.vmem [resolvable:$true] %s129
          %135 = dma.hbm_to_vmem [thread:$0]  %s128, 128, %s130, [#allocation9], 64, 64, 4
        $region16: #{tpu_custom_call.1} parent=11 // pred_fallthru
          _
      $region12: #{tpu_custom_call.1} parent=5 // pred_fallthru
        _
      %p136 = scmp.lt.s32.totalorder %s15, 2
      // Predicated region
      $region17: #{tpu_custom_call.1} parent=5 // pred_check
        %p137 = pneg %p136
      $region18: #{tpu_custom_call.1} parent=5 // pred_check_branch
        %139 = sbr.rel (%p137) target = $region20
      $region19: #{tpu_custom_call.1} parent=5 // pred_region
        // Predicated region
        $region21: #{tpu_custom_call.1} parent=19 // pred_check
          %p140 = pneg %p47
        $region22: #{tpu_custom_call.1} parent=19 // pred_check_branch
          %142 = sbr.rel (%p140) target = $region24
        $region23: #{tpu_custom_call.1} parent=19 // pred_region
          %s143 = sand.u32 %s37, 1
          %s144 = scalar_lea.sflag [#allocation6], %s143
          %s145 = sand.u32 %s37, 1
          %s146 = smul.addr %s145, 4
          %s147 = scalar_lea.vmem [#allocation5], %s146
          %s149 = ssub.s32 64, 64
          %150 = vsyncadd %s144, %s149
          %s151 = smul.addr %s22, 64
          %s152 = scalar_lea.hbm %s0, %s151
          %s154 = sshll.u32 %s147, 4
          %s155 = int_to_ptr.vmem [resolvable:$true] %s154
          %157 = dma.hbm_to_vmem [thread:$0]  %s152, 64, %s155, %s144
        $region24: #{tpu_custom_call.1} parent=19 // pred_fallthru
          _
      $region20: #{tpu_custom_call.1} parent=5 // pred_fallthru
        _
      %p158 = scmp.le.s32.totalorder 1, %s15
      %p159 = scmp.lt.s32.totalorder %s15, 3
      %p160 = pnand %p158, %p159
      %p161 = pneg %p160
      // Predicated region
      $region25: #{tpu_custom_call.1} parent=5 // pred_check
        _
      $region26: #{tpu_custom_call.1} parent=5 // pred_check_branch
        %163 = sbr.rel (%p160) target = $region28
      $region27: #{tpu_custom_call.1} parent=5 // pred_region
        %s164 = ssub.s32 %s15, 1
        %s165 = sand.u32 %s40, 1
        %s166 = scalar_lea.sflag [#allocation6], %s165
        %s167 = sand.u32 %s40, 1
        %s168 = smul.addr %s167, 4
        %s169 = scalar_lea.vmem [#allocation5], %s168
        // Predicated region
        $region29: #{tpu_custom_call.1} parent=27 // pred_check
          %p170 = pneg %p53
        $region30: #{tpu_custom_call.1} parent=27 // pred_check_branch
          %172 = sbr.rel (%p170) target = $region32
        $region31: #{tpu_custom_call.1} parent=27 // pred_region
          %173 = dma.done %s166, 64
        $region32: #{tpu_custom_call.1} parent=27 // pred_fallthru
          _
        // Predicated region
        $region33: #{tpu_custom_call.1} parent=27 // pred_check
          %p174 = pneg %p79
        $region34: #{tpu_custom_call.1} parent=27 // pred_check_branch
          %176 = sbr.rel (%p174) target = $region36
        $region35: #{tpu_custom_call.1} parent=27 // pred_region
          %177 = dma.done [#allocation9], 128
        $region36: #{tpu_custom_call.1} parent=27 // pred_fallthru
          _
        %s178 = sand.u32 %s40, 1
        %s179 = scalar_lea.sflag [#allocation6], %s178
        %s180 = sand.u32 %s40, 1
        %s181 = smul.addr %s180, 4
        %s182 = scalar_lea.vmem [#allocation5], %s181
        %p183 = pneg %p53
        %p184 = pneg %p50
        %p185 = pneg %p79
        %p186 = pneg %p76
        %p187 = pneg %p105
        %p188 = pneg %p102
        %s189 = sand.u32 %s92, 1
        %s190 = scalar_lea.sflag [#allocation7], %s189
        %s191 = sand.u32 %s92, 1
        %s192 = scalar_lea.vmem [#allocation10], %s191
        %s193 = smul.u32 2, %s25
        %p195 = scmp.eq.s32.totalorder %s25, 0
        // Predicated region
        $region37: #{tpu_custom_call.1} parent=27 // pred_check
          %p196 = pneg %p195
        $region38: #{tpu_custom_call.1} parent=27 // pred_check_branch
          %198 = sbr.rel (%p196) target = $region40
        $region39: #{tpu_custom_call.1} parent=27 // pred_region
          %vm199 = vcmask 7168
          %200 = vst.msk [vmem:[#allocation2] sm:$0xff] %vm199, -1e+30
          %201 = vst.msk [vmem:[#allocation3] sm:$0xff] %vm199, 0.0
          %202 = vst.msk [vmem:[#allocation4] sm:$0xff] %vm199, 0.0
        $region40: #{tpu_custom_call.1} parent=27 // pred_fallthru
          _
        %v203 = vld [vmem:[%s169] sm:$0xf]
        %v204 = vld [vmem:[#allocation8] sm:$0xf]
        %v205 = vld [vmem:[#allocation8 + $0x4] sm:$0xf]
        %v208 = vunpack.c.l.b16 %v204
        %v209 = vunpack.c.l.b16 %v205
        %v210 = vpack.c.b16 %v209, %v208
        %vm211 = vcmask 261120
        %v213 = vsel %vm211, %v203, 0
        %v216 = vsel %vm211, %v210, 0
        %218 = vmatprep.subr.bf16.mxu0 0
        %219 = vmatpush1.bf16.xpose.msra.mxu0 %v216
        %220 = vmatprep.subr.bf16.mxu0 0
        %221 = vmatpush1.bf16.xpose.msra.mxu0 0
        %222 = vmatprep.subr.bf16.mxu0 0
        %223 = vmatpush1.bf16.xpose.msra.mxu0 0
        %224 = vmatprep.subr.bf16.mxu0 0
        %225 = vmatpush1.bf16.xpose.msra.mxu0 0
        %226 = vmatprep.subr.bf16.mxu0 0
        %227 = vmatpush1.bf16.xpose.msra.mxu0 0
        %228 = vmatprep.subr.bf16.mxu0 0
        %229 = vmatpush1.bf16.xpose.msra.mxu0 0
        %230 = vmatprep.subr.bf16.mxu0 0
        %231 = vmatpush1.bf16.xpose.msra.mxu0 0
        %232 = vmatprep.subr.bf16.mxu0 0
        %233 = vmatpush1.bf16.xpose.msra.mxu0 0
        %234 = vmatprep.subr.bf16.mxu0 0
        %235 = vmatpush1.bf16.xpose.msra.mxu0 0
        %236 = vmatprep.subr.bf16.mxu0 0
        %237 = vmatpush1.bf16.xpose.msra.mxu0 0
        %238 = vmatprep.subr.bf16.mxu0 0
        %239 = vmatpush1.bf16.xpose.msra.mxu0 0
        %240 = vmatprep.subr.bf16.mxu0 0
        %241 = vmatpush1.bf16.xpose.msra.mxu0 0
        %242 = vmatprep.subr.bf16.mxu0 0
        %243 = vmatpush1.bf16.xpose.msra.mxu0 0
        %244 = vmatprep.subr.bf16.mxu0 0
        %245 = vmatpush1.bf16.xpose.msra.mxu0 0
        %246 = vmatprep.subr.bf16.mxu0 0
        %247 = vmatpush1.bf16.xpose.msra.mxu0 0
        %248 = vmatprep.subr.bf16.mxu0 0
        %249 = vmatpush1.bf16.xpose.msra.mxu0 0
        %250 = vmatprep.mubr.bf16.mxu0 0
        %251 = vmatmul.mubr.bf16.gmra.mrb[0].mxu0 %v213
        %v252 = vpop.f32.mrb[0].mxu0
        %v253 = vadd.f32 0.0, %v252
        %v254 = vpop.f32.mrb[0].mxu0
        %v255 = vpop.f32.mrb[0].mxu0
        %v256 = vpop.f32.mrb[0].mxu0
        %257 = vdwg.mxu0
        %s258 = smul.u32 %s24, 8
        %s259 = smul.u32 %s25, 16
        %v260 = vlaneseq
        %v261 = vshrl.u32 %v260, 7
        %v262 = vstv %s258
        %v263 = vadd.s32 %v262, %v261
        %v264 = vlaneseq
        %v265 = vand.u32 %v264, 127
        %v266 = vstv %s259
        %v267 = vadd.s32 %v266, %v265
        %s268 = sadd.s32 %s259, 16
        %p269 = scmp.lt.s32.totalorder %s258, %s268
        %s270 = sadd.s32 %s258, 8
        %p271 = scmp.lt.s32.totalorder %s259, %s270
        %p272 = pnand %p269, %p271
        %p273 = pneg %p272
        // Predicated region
        $region41: #{tpu_custom_call.1} parent=27 // pred_check
          _
        $region42: #{tpu_custom_call.1} parent=27 // pred_check_branch
          %275 = sbr.rel (%p272) target = $region44
        $region43: #{tpu_custom_call.1} parent=27 // pred_region
          %vm276 = vcmp.eq.s32.totalorder %v263, %v267
          %v277 = vsel %vm276, -1e+30, %v253
        $region44: #{tpu_custom_call.1} parent=27 // pred_fallthru
          %v278 = vphi 0, %v277
        // Predicated region
        $region45: #{tpu_custom_call.1} parent=27 // pred_check
          %p279 = pneg %p272
        $region46: #{tpu_custom_call.1} parent=27 // pred_check_branch
          %281 = sbr.rel (%p279) target = $region48
        $region47: #{tpu_custom_call.1} parent=27 // pred_region
          _
        $region48: #{tpu_custom_call.1} parent=27 // pred_fallthru
          %v282 = vphi %v278, %v253
        %v283 = vld [vmem:[#allocation2] sm:$0xff]
        %vm284 = vcmask 130048
        %v285 = vsel %vm284, %v282, -inf
        %286 = vmax.xlane.f32.xlu0 %v285
        %v287 = vpop.xlane.xlu0 %286
        %v288 = vmax.f32 %v283, %v287
        %v289 = vsub.f32 %v283, %v288
        %v290 = vmul.f32 %v289, 1.442695
        %v291 = vpow.pop %v290
        %v292 = vld [vmem:[#allocation3] sm:$0xff]
        %v293 = vmul.f32 %v291, %v292
        %295 = vset.pattern.permute.xlu0 0
        %296 = vperm.xlu0 %295, %v288
        %v297 = vpop.permute.xlu0 %296
        %v299 = vsub.f32 %v282, %v297
        %v300 = vmul.f32 %v299, 1.442695
        %v301 = vpow.pop %v300
        %v302 = vsel %vm284, %v301, 0.0
        %303 = vadd.xlane.f32.xlu0 %v302
        %v304 = vpop.xlane.xlu0 %303
        %v305 = vadd.f32 %v293, %v304
        %vm306 = vcmask 7168
        %307 = vst.msk [vmem:[#allocation3] sm:$0xff] %vm306, %v305
        %308 = vst.msk [vmem:[#allocation2] sm:$0xff] %vm306, %v288
        %p309 = scmp.lt.s32.totalorder %s270, %s268
        %s310 = sadd.s32 %s258, 16
        %p311 = scmp.lt.s32.totalorder %s259, %s310
        %p312 = pnand %p309, %p311
        %p313 = pneg %p312
        %s314 = ssub.s32 %s258, 8
        %p315 = scmp.lt.s32.totalorder %s314, %s268
        %p316 = scmp.lt.s32.totalorder %s259, %s258
        %p317 = pnand %p315, %p316
        %p318 = pneg %p317
        %p319 = por %p313, %p318
        // Predicated region
        $region49: #{tpu_custom_call.1} parent=27 // pred_check
          %p320 = pneg %p319
        $region50: #{tpu_custom_call.1} parent=27 // pred_check_branch
          %322 = sbr.rel (%p320) target = $region52
        $region51: #{tpu_custom_call.1} parent=27 // pred_region
          %vm323 = vcmp.lt.s32.totalorder %v263, 8
          %v324 = vadd.s32 %v263, 8
          %vm325 = vcmp.eq.s32.totalorder %v267, %v324
          %v326 = vsel %vm323, 1, 0
          %vm327 = vcmp.eq.s32.totalorder %v326, 1
          %vm328 = vmand %vm327, %vm325
          %vm329 = vcmp.ge.s32.totalorder %v263, 8
          %v330 = vsub.s32 %v263, 8
          %vm331 = vcmp.eq.s32.totalorder %v267, %v330
          %v332 = vsel %vm329, 1, 0
          %vm333 = vcmp.eq.s32.totalorder %v332, 1
          %vm334 = vmand %vm333, %vm331
          %vm335 = vmor %vm328, %vm334
          %v336 = vld [vmem:[#allocation4] sm:$0xff]
          %v337 = vsel %vm335, %v282, 0.0
          %v338 = vsel %vm284, %v337, 0.0
          %339 = vadd.xlane.f32.xlu0 %v338
          %v340 = vpop.xlane.xlu0 %339
          %v341 = vadd.f32 %v336, %v340
          %342 = vst.msk [vmem:[#allocation4] sm:$0xff] %vm306, %v341
        $region52: #{tpu_custom_call.1} parent=27 // pred_fallthru
          _
        // Predicated region
        $region53: #{tpu_custom_call.1} parent=27 // pred_check
          %p343 = pneg %p195
        $region54: #{tpu_custom_call.1} parent=27 // pred_check_branch
          %345 = sbr.rel (%p343) target = $region56
        $region55: #{tpu_custom_call.1} parent=27 // pred_region
          %v346 = vld [vmem:[#allocation2] sm:$0xff]
          %v347 = vld [vmem:[#allocation3] sm:$0xff]
          %v348 = vlog2.pop %v347
          %v349 = vmul.f32 %v348, 0.6931472
          %v350 = vadd.f32 %v346, %v349
          %v351 = vld [vmem:[#allocation4] sm:$0xff]
          %v352 = vsub.f32 %v350, %v351
          %353 = vxpose.xlu0.b32.start [1/16] %v352, 128
          %354 = vxpose.xlu0.b32.cont [2/16] 0.0, 128
          %355 = vxpose.xlu0.b32.cont [3/16] 0.0, 128
          %356 = vxpose.xlu0.b32.cont [4/16] 0.0, 128
          %357 = vxpose.xlu0.b32.cont [5/16] 0.0, 128
          %358 = vxpose.xlu0.b32.cont [6/16] 0.0, 128
          %359 = vxpose.xlu0.b32.cont [7/16] 0.0, 128
          %360 = vxpose.xlu0.b32.cont [8/16] 0.0, 128
          %361 = vxpose.xlu0.b32.cont [9/16] 0.0, 128
          %362 = vxpose.xlu0.b32.cont [10/16] 0.0, 128
          %363 = vxpose.xlu0.b32.cont [11/16] 0.0, 128
          %364 = vxpose.xlu0.b32.cont [12/16] 0.0, 128
          %365 = vxpose.xlu0.b32.cont [13/16] 0.0, 128
          %366 = vxpose.xlu0.b32.cont [14/16] 0.0, 128
          %367 = vxpose.xlu0.b32.cont [15/16] 0.0, 128
          %368 = vxpose.xlu0.b32.end [16/16] 0.0, 128
          %v369 = vpop.trf.xlu0
          %v370 = vpop.trf.xlu0
          %v371 = vpop.trf.xlu0
          %v372 = vpop.trf.xlu0
          %v373 = vpop.trf.xlu0
          %v374 = vpop.trf.xlu0
          %v375 = vpop.trf.xlu0
          %v376 = vpop.trf.xlu0
          %v377 = vpop.trf.xlu0
          %v378 = vpop.trf.xlu0
          %v379 = vpop.trf.xlu0
          %v380 = vpop.trf.xlu0
          %v381 = vpop.trf.xlu0
          %v382 = vpop.trf.xlu0
          %v383 = vpop.trf.xlu0
          %v384 = vpop.trf.xlu0
          %vm385 = vcmask 57344
          %386 = vst.msk [vmem:[%s192] sm:$0x1] %vm385, %v369
        $region56: #{tpu_custom_call.1} parent=27 // pred_fallthru
          _
        %s387 = sand.u32 %s92, 1
        %s388 = scalar_lea.sflag [#allocation7], %s387
        %s389 = sand.u32 %s92, 1
        %s390 = scalar_lea.vmem [#allocation10], %s389
        // Predicated region
        $region57: #{tpu_custom_call.1} parent=27 // pred_check
          %p391 = pneg %p102
        $region58: #{tpu_custom_call.1} parent=27 // pred_check_branch
          %393 = sbr.rel (%p391) target = $region60
        $region59: #{tpu_custom_call.1} parent=27 // pred_region
          %s395 = ssub.s32 16, 16
          %396 = vsyncadd %s388, %s395
          %s397 = smul.addr %s24, 16
          %s398 = scalar_lea.hbm %s2, %s397
          %s400 = sshll.u32 %s390, 4
          %s401 = int_to_ptr.vmem [resolvable:$true] %s400
          %403 = dma.vmem_to_hbm [thread:$0]  %s401, 16, %s398, %s388
        $region60: #{tpu_custom_call.1} parent=27 // pred_fallthru
          _
      $region28: #{tpu_custom_call.1} parent=5 // pred_fallthru
        _
      %p404 = scmp.le.s32.totalorder 2, %s15
      // Predicated region
      $region61: #{tpu_custom_call.1} parent=5 // pred_check
        %p405 = pneg %p404
      $region62: #{tpu_custom_call.1} parent=5 // pred_check_branch
        %407 = sbr.rel (%p405) target = $region64
      $region63: #{tpu_custom_call.1} parent=5 // pred_region
        %s408 = ssub.s32 %s15, 2
        // Predicated region
        $region65: #{tpu_custom_call.1} parent=63 // pred_check
          %p409 = pneg %p108
        $region66: #{tpu_custom_call.1} parent=63 // pred_check_branch
          %411 = sbr.rel (%p409) target = $region68
        $region67: #{tpu_custom_call.1} parent=63 // pred_region
          %s412 = sand.u32 %s93, 1
          %s413 = scalar_lea.sflag [#allocation7], %s412
          %s414 = sand.u32 %s93, 1
          %s415 = scalar_lea.vmem [#allocation10], %s414
          %416 = dma.done %s413, 16
        $region68: #{tpu_custom_call.1} parent=63 // pred_fallthru
          _
      $region64: #{tpu_custom_call.1} parent=5 // pred_fallthru
        _
    $region6: #{tpu_custom_call.1} parent=1 // loop_footer
      %s19 = sadd.s32 1, %s15
    $region7: #{tpu_custom_call.1} parent=1 // loop_footer_branch
      %14 = sbr.rel target = $region3
    $region8: #{tpu_custom_call.1} parent=1 // loop_exit
      _
    %417 = vsyncpa [#allocation6], 1
    %s418 = scalar_lea.sflag [#allocation6], 1
    %419 = vsyncpa %s418, 1
    %420 = vsyncpa [#allocation9], 1
    %421 = vsyncpa [#allocation7], 1
    %s422 = scalar_lea.sflag [#allocation7], 1
    %423 = vsyncpa %s422, 1

</llo_original>
